<compile_context>
chip_gen: v5e
topology: v5e:2x2
jax: 0.10.0
libtpu: 0.0.40
codegen_flags: <defaults>
</compile_context>

<pallas_src>
import numpy as np
import jax
import jax.numpy as jnp
from jax.experimental import pallas as pl
from jax.experimental.pallas import tpu as pltpu

NEG_SLOPE = 0.01  # nn.LeakyReLU() default


def _leaky(x):
    # vmul + vmax instead of vmul + vcmp + vsel
    return jnp.maximum(x, NEG_SLOPE * x)


def _round_up(x, m):
    return ((x + m - 1) // m) * m


def generator_mlp_kernel(*refs):
    """One batch tile of the whole Generator_ MLP.

    refs = (z_ref, w0_ref, b0_ref, ..., wN_ref, bN_ref, o_ref)
    z_ref is bf16; weights bf16; biases f32; output f32 (lane-dense width).
    """
    z_ref, o_ref = refs[0], refs[-1]
    wb_refs = refs[1:-1]
    n = len(wb_refs) // 2

    h = z_ref[...]  # already bf16 (cast in the wrapper)
    for li in range(n):
        w_ref = wb_refs[2 * li]
        b_ref = wb_refs[2 * li + 1]
        # MXU: bf16 x bf16 -> f32 accumulate; bias add in f32 on the VPU.
        h = jnp.dot(h, w_ref[...], preferred_element_type=jnp.float32) + b_ref[...]
        if li < n - 1:
            h = _leaky(h).astype(jnp.bfloat16)
    # Final layer: no activation; store to lane-dense (tm, 128*k) tile.
    o_ref[...] = h.astype(o_ref.dtype)


def generator_forward(z, params, out_shape, *, tm=512):
    """params = list of (W, b) for the linear layers, W: (fan_in, fan_out)."""
    B, latent_dim = z.shape
    flat_out = params[-1][0].shape[1]

    # ---- batch tiling ----------------------------------------------------
    # Round user tm to a multiple of 8 (sublane constraint), clamp to batch.
    tm = _round_up(max(8, int(tm)), 8)
    b_cap = _round_up(B, 8)
    tm = min(tm, b_cap)
    # v7x: make sure the "parallel" batch axis has >= 2 grid steps whenever
    # the batch allows it, so both TensorCores get work.
    if _round_up(B, tm) // tm < 2 and b_cap >= 16:
        tm = _round_up(pl.cdiv(B, 2), 8)
    b_pad = _round_up(B, tm)

    # z -> bf16 in the wrapper (halves z DMA, removes in-kernel cast).
    z_in = z.astype(jnp.bfloat16)
    if b_pad != B:
        z_in = jnp.pad(z_in, ((0, b_pad - B), (0, 0)))

    # ---- lane-dense output: pad last layer's columns up to a 128 multiple --
    n_out_pad = _round_up(flat_out, 128)

    args = [z_in]
    in_specs = [pl.BlockSpec((tm, latent_dim), lambda i: (i, 0))]
    n_total = len(params)
    flops = 0
    weight_bytes = 0
    for li, (w, b) in enumerate(params):
        w = w.astype(jnp.bfloat16)
        b = b.reshape(1, -1).astype(jnp.float32)
        if li == n_total - 1 and n_out_pad != flat_out:
            pad_cols = n_out_pad - flat_out
            w = jnp.pad(w, ((0, 0), (0, pad_cols)))
            b = jnp.pad(b, ((0, 0), (0, pad_cols)))
        args.append(w)
        args.append(b)
        # Constant index_maps -> weights/biases stay VMEM-resident across steps.
        # At n_units=128 the weights are ~140 KiB total, so default double
        # buffering is harmless.
        # TODO(synk): for large n_units (>=1024) on v7x (64 MiB VMEM), tile the
        # hidden matmuls over a K-reduction grid axis and set vmem_limit_bytes
        # instead of keeping full (n_units, n_units) blocks resident.
        in_specs.append(pl.BlockSpec(w.shape, lambda i: (0, 0)))
        in_specs.append(pl.BlockSpec(b.shape, lambda i: (0, 0)))
        flops += 2 * b_pad * w.shape[0] * w.shape[1]
        weight_bytes += w.size * 2 + b.size * 4

    bytes_accessed = (b_pad * latent_dim * 2      # z (bf16)
                      + b_pad * n_out_pad * 4     # output (f32)
                      + weight_bytes)
    cost = pl.CostEstimate(flops=int(flops), transcendentals=0,
                           bytes_accessed=int(bytes_accessed))

    out = pl.pallas_call(
        generator_mlp_kernel,
        grid=(b_pad // tm,),
        in_specs=in_specs,
        out_specs=pl.BlockSpec((tm, n_out_pad), lambda i: (i, 0)),
        out_shape=jax.ShapeDtypeStruct((b_pad, n_out_pad), jnp.float32),
        compiler_params=pltpu.CompilerParams(
            dimension_semantics=("parallel",)),
        cost_estimate=cost,
    )(*args)

    # Slice off batch padding and the lane padding of the final layer.
    out = out[:B, :flat_out]
    if isinstance(out_shape, tuple) and len(out_shape) > 1:
        out = out.reshape(B, *out_shape)
    return out


def init_generator_params(key, latent_dim, out_shape, n_layers=4, n_units=128):
    """Deterministic synthetic init mirroring the PyTorch module's layer shapes."""
    if isinstance(out_shape, tuple) and len(out_shape) > 1:
        out = int(np.prod(out_shape))
    else:
        out = int(out_shape)

    dims = [(latent_dim, n_units)]
    dims += [(n_units, n_units)] * n_layers
    dims += [(n_units, out)]

    params = []
    for i, (fan_in, fan_out) in enumerate(dims):
        kw, kb, key = jax.random.split(jax.random.fold_in(key, i), 3)
        scale = 1.0 / np.sqrt(fan_in)
        w = jax.random.uniform(kw, (fan_in, fan_out), jnp.float32, -scale, scale)
        b = jax.random.uniform(kb, (fan_out,), jnp.float32, -scale, scale)
        params.append((w, b))
    return params


def _reference_forward(z, params, out_shape):
    """Pure-JAX reference emulating the same bf16-matmul / f32-accumulate math."""
    h = z.astype(jnp.float32)
    n = len(params)
    for i, (w, b) in enumerate(params):
        h = jnp.dot(h.astype(jnp.bfloat16), w.astype(jnp.bfloat16),
                    preferred_element_type=jnp.float32) + b.astype(jnp.float32)
        if i < n - 1:
            h = jnp.maximum(h, NEG_SLOPE * h)
    if isinstance(out_shape, tuple) and len(out_shape) > 1:
        h = h.reshape(z.shape[0], *out_shape)
    return h


if __name__ == "__main__":
    # Small shapes consistent with the module's forward.
    B = 20               # non-multiple of 8 -> exercises batch padding path
    latent_dim = 16
    n_units = 128
    n_layers = 4
    out_shape = (4, 8)   # tag == 1 branch -> flat_out=32 (lane-padded to 128)

    key = jax.random.PRNGKey(0)
    k_z, k_p = jax.random.split(key)
    z = jax.random.normal(k_z, (B, latent_dim), jnp.float32)
    params = init_generator_params(k_p, latent_dim, out_shape,
                                   n_layers=n_layers, n_units=n_units)

    ref = _reference_forward(z, params, out_shape)

    # Default tiling: tm clamps to the batch, then splits into a 2-step
    # parallel grid (v7x dual-TensorCore path) with a lane-dense output.
    out = generator_forward(z, params, out_shape)
    out = jax.block_until_ready(out)
    assert out.shape == (B, *out_shape), out.shape
    np.testing.assert_allclose(np.asarray(out), np.asarray(ref),
                               rtol=1e-3, atol=1e-3)

    # Small explicit tile -> 3-step batch grid (exercises resident-weight path).
    out2 = generator_forward(z, params, out_shape, tm=8)
    out2 = jax.block_until_ready(out2)
    np.testing.assert_allclose(np.asarray(out2), np.asarray(ref),
                               rtol=1e-3, atol=1e-3)

    # tag == 0 branch (scalar out_shape) with a lane-padded 10-wide output,
    # plus a non-multiple-of-8 user tm (rounded up internally).
    out_shape_1d = 10
    params_1d = init_generator_params(jax.random.fold_in(k_p, 7), latent_dim,
                                      out_shape_1d, n_layers=n_layers,
                                      n_units=n_units)
    ref_1d = _reference_forward(z, params_1d, out_shape_1d)
    out3 = generator_forward(z, params_1d, out_shape_1d, tm=100)
    out3 = jax.block_until_ready(out3)
    assert out3.shape == (B, out_shape_1d), out3.shape
    np.testing.assert_allclose(np.asarray(out3), np.asarray(ref_1d),
                               rtol=1e-3, atol=1e-3)

    print("KERNEL_OK")
</pallas_src>

<mosaic_0001>
module attributes {stable_mosaic.version = 11 : i64} {
  func.func @generator_mlp_kernel(%arg0: i32, %arg1: memref<16x16xbf16, #tpu.memory_space<vmem>>, %arg2: memref<16x128xbf16, #tpu.memory_space<vmem>>, %arg3: memref<1x128xf32, #tpu.memory_space<vmem>>, %arg4: memref<128x128xbf16, #tpu.memory_space<vmem>>, %arg5: memref<1x128xf32, #tpu.memory_space<vmem>>, %arg6: memref<128x128xbf16, #tpu.memory_space<vmem>>, %arg7: memref<1x128xf32, #tpu.memory_space<vmem>>, %arg8: memref<128x128xbf16, #tpu.memory_space<vmem>>, %arg9: memref<1x128xf32, #tpu.memory_space<vmem>>, %arg10: memref<128x128xbf16, #tpu.memory_space<vmem>>, %arg11: memref<1x128xf32, #tpu.memory_space<vmem>>, %arg12: memref<128x128xbf16, #tpu.memory_space<vmem>>, %arg13: memref<1x128xf32, #tpu.memory_space<vmem>>, %arg14: memref<16x128xf32, #tpu.memory_space<vmem>>) attributes {dimension_semantics = [#tpu.dimension_semantics<parallel>], iteration_bounds = array<i64: 2>, scalar_prefetch = 0 : i64, scratch_operands = 0 : i64, tpu.core_type = #tpu.core_type<tc>, window_params = [{transform_indices = @transform_0, window_bounds = array<i64: 16, 16>}, {pipeline_mode = #tpu.pipeline_mode<synchronous>, transform_indices = @transform_1, window_bounds = array<i64: 16, 128>}, {pipeline_mode = #tpu.pipeline_mode<synchronous>, transform_indices = @transform_2, window_bounds = array<i64: 1, 128>}, {pipeline_mode = #tpu.pipeline_mode<synchronous>, transform_indices = @transform_3, window_bounds = array<i64: 128, 128>}, {pipeline_mode = #tpu.pipeline_mode<synchronous>, transform_indices = @transform_4, window_bounds = array<i64: 1, 128>}, {pipeline_mode = #tpu.pipeline_mode<synchronous>, transform_indices = @transform_5, window_bounds = array<i64: 128, 128>}, {pipeline_mode = #tpu.pipeline_mode<synchronous>, transform_indices = @transform_6, window_bounds = array<i64: 1, 128>}, {pipeline_mode = #tpu.pipeline_mode<synchronous>, transform_indices = @transform_7, window_bounds = array<i64: 128, 128>}, {pipeline_mode = #tpu.pipeline_mode<synchronous>, transform_indices = @transform_8, window_bounds = array<i64: 1, 128>}, {pipeline_mode = #tpu.pipeline_mode<synchronous>, transform_indices = @transform_9, window_bounds = array<i64: 128, 128>}, {pipeline_mode = #tpu.pipeline_mode<synchronous>, transform_indices = @transform_10, window_bounds = array<i64: 1, 128>}, {pipeline_mode = #tpu.pipeline_mode<synchronous>, transform_indices = @transform_11, window_bounds = array<i64: 128, 128>}, {pipeline_mode = #tpu.pipeline_mode<synchronous>, transform_indices = @transform_12, window_bounds = array<i64: 1, 128>}, {transform_indices = @transform_13, window_bounds = array<i64: 16, 128>}]} {
    %c0 = arith.constant 0 : index
    %c0_0 = arith.constant 0 : index
    %0 = vector.load %arg1[%c0, %c0_0] : memref<16x16xbf16, #tpu.memory_space<vmem>>, vector<16x16xbf16>
    %c0_1 = arith.constant 0 : index
    %c0_2 = arith.constant 0 : index
    %1 = vector.load %arg2[%c0_1, %c0_2] : memref<16x128xbf16, #tpu.memory_space<vmem>>, vector<16x128xbf16>
    %cst = arith.constant dense<0.000000e+00> : vector<16x128xf32>
    %2 = tpu.matmul %0, %1, %cst {dimension_numbers = #tpu.dot_dimension_numbers<[1], [0], [0], [1], [0, 0, 1, 1], [], []>} : vector<16x16xbf16>, vector<16x128xbf16>, vector<16x128xf32> -> vector<16x128xf32>
    %c0_3 = arith.constant 0 : index
    %c0_4 = arith.constant 0 : index
    %3 = vector.load %arg3[%c0_3, %c0_4] : memref<1x128xf32, #tpu.memory_space<vmem>>, vector<1x128xf32>
    %4 = vector.broadcast %3 : vector<1x128xf32> to vector<16x128xf32>
    %5 = arith.addf %2, %4 : vector<16x128xf32>
    %cst_5 = arith.constant 0.00999999977 : f32
    %6 = vector.broadcast %cst_5 : f32 to vector<16x128xf32>
    %7 = arith.mulf %6, %5 : vector<16x128xf32>
    %8 = arith.maximumf %5, %7 : vector<16x128xf32>
    %9 = arith.truncf %8 : vector<16x128xf32> to vector<16x128xbf16>
    %c0_6 = arith.constant 0 : index
    %c0_7 = arith.constant 0 : index
    %10 = vector.load %arg4[%c0_6, %c0_7] : memref<128x128xbf16, #tpu.memory_space<vmem>>, vector<128x128xbf16>
    %cst_8 = arith.constant dense<0.000000e+00> : vector<16x128xf32>
    %11 = tpu.matmul %9, %10, %cst_8 {dimension_numbers = #tpu.dot_dimension_numbers<[1], [0], [0], [1], [0, 0, 1, 1], [], []>} : vector<16x128xbf16>, vector<128x128xbf16>, vector<16x128xf32> -> vector<16x128xf32>
    %c0_9 = arith.constant 0 : index
    %c0_10 = arith.constant 0 : index
    %12 = vector.load %arg5[%c0_9, %c0_10] : memref<1x128xf32, #tpu.memory_space<vmem>>, vector<1x128xf32>
    %13 = vector.broadcast %12 : vector<1x128xf32> to vector<16x128xf32>
    %14 = arith.addf %11, %13 : vector<16x128xf32>
    %cst_11 = arith.constant 0.00999999977 : f32
    %15 = vector.broadcast %cst_11 : f32 to vector<16x128xf32>
    %16 = arith.mulf %15, %14 : vector<16x128xf32>
    %17 = arith.maximumf %14, %16 : vector<16x128xf32>
    %18 = arith.truncf %17 : vector<16x128xf32> to vector<16x128xbf16>
    %c0_12 = arith.constant 0 : index
    %c0_13 = arith.constant 0 : index
    %19 = vector.load %arg6[%c0_12, %c0_13] : memref<128x128xbf16, #tpu.memory_space<vmem>>, vector<128x128xbf16>
    %cst_14 = arith.constant dense<0.000000e+00> : vector<16x128xf32>
    %20 = tpu.matmul %18, %19, %cst_14 {dimension_numbers = #tpu.dot_dimension_numbers<[1], [0], [0], [1], [0, 0, 1, 1], [], []>} : vector<16x128xbf16>, vector<128x128xbf16>, vector<16x128xf32> -> vector<16x128xf32>
    %c0_15 = arith.constant 0 : index
    %c0_16 = arith.constant 0 : index
    %21 = vector.load %arg7[%c0_15, %c0_16] : memref<1x128xf32, #tpu.memory_space<vmem>>, vector<1x128xf32>
    %22 = vector.broadcast %21 : vector<1x128xf32> to vector<16x128xf32>
    %23 = arith.addf %20, %22 : vector<16x128xf32>
    %cst_17 = arith.constant 0.00999999977 : f32
    %24 = vector.broadcast %cst_17 : f32 to vector<16x128xf32>
    %25 = arith.mulf %24, %23 : vector<16x128xf32>
    %26 = arith.maximumf %23, %25 : vector<16x128xf32>
    %27 = arith.truncf %26 : vector<16x128xf32> to vector<16x128xbf16>
    %c0_18 = arith.constant 0 : index
    %c0_19 = arith.constant 0 : index
    %28 = vector.load %arg8[%c0_18, %c0_19] : memref<128x128xbf16, #tpu.memory_space<vmem>>, vector<128x128xbf16>
    %cst_20 = arith.constant dense<0.000000e+00> : vector<16x128xf32>
    %29 = tpu.matmul %27, %28, %cst_20 {dimension_numbers = #tpu.dot_dimension_numbers<[1], [0], [0], [1], [0, 0, 1, 1], [], []>} : vector<16x128xbf16>, vector<128x128xbf16>, vector<16x128xf32> -> vector<16x128xf32>
    %c0_21 = arith.constant 0 : index
    %c0_22 = arith.constant 0 : index
    %30 = vector.load %arg9[%c0_21, %c0_22] : memref<1x128xf32, #tpu.memory_space<vmem>>, vector<1x128xf32>
    %31 = vector.broadcast %30 : vector<1x128xf32> to vector<16x128xf32>
    %32 = arith.addf %29, %31 : vector<16x128xf32>
    %cst_23 = arith.constant 0.00999999977 : f32
    %33 = vector.broadcast %cst_23 : f32 to vector<16x128xf32>
    %34 = arith.mulf %33, %32 : vector<16x128xf32>
    %35 = arith.maximumf %32, %34 : vector<16x128xf32>
    %36 = arith.truncf %35 : vector<16x128xf32> to vector<16x128xbf16>
    %c0_24 = arith.constant 0 : index
    %c0_25 = arith.constant 0 : index
    %37 = vector.load %arg10[%c0_24, %c0_25] : memref<128x128xbf16, #tpu.memory_space<vmem>>, vector<128x128xbf16>
    %cst_26 = arith.constant dense<0.000000e+00> : vector<16x128xf32>
    %38 = tpu.matmul %36, %37, %cst_26 {dimension_numbers = #tpu.dot_dimension_numbers<[1], [0], [0], [1], [0, 0, 1, 1], [], []>} : vector<16x128xbf16>, vector<128x128xbf16>, vector<16x128xf32> -> vector<16x128xf32>
    %c0_27 = arith.constant 0 : index
    %c0_28 = arith.constant 0 : index
    %39 = vector.load %arg11[%c0_27, %c0_28] : memref<1x128xf32, #tpu.memory_space<vmem>>, vector<1x128xf32>
    %40 = vector.broadcast %39 : vector<1x128xf32> to vector<16x128xf32>
    %41 = arith.addf %38, %40 : vector<16x128xf32>
    %cst_29 = arith.constant 0.00999999977 : f32
    %42 = vector.broadcast %cst_29 : f32 to vector<16x128xf32>
    %43 = arith.mulf %42, %41 : vector<16x128xf32>
    %44 = arith.maximumf %41, %43 : vector<16x128xf32>
    %45 = arith.truncf %44 : vector<16x128xf32> to vector<16x128xbf16>
    %c0_30 = arith.constant 0 : index
    %c0_31 = arith.constant 0 : index
    %46 = vector.load %arg12[%c0_30, %c0_31] : memref<128x128xbf16, #tpu.memory_space<vmem>>, vector<128x128xbf16>
    %cst_32 = arith.constant dense<0.000000e+00> : vector<16x128xf32>
    %47 = tpu.matmul %45, %46, %cst_32 {dimension_numbers = #tpu.dot_dimension_numbers<[1], [0], [0], [1], [0, 0, 1, 1], [], []>} : vector<16x128xbf16>, vector<128x128xbf16>, vector<16x128xf32> -> vector<16x128xf32>
    %c0_33 = arith.constant 0 : index
    %c0_34 = arith.constant 0 : index
    %48 = vector.load %arg13[%c0_33, %c0_34] : memref<1x128xf32, #tpu.memory_space<vmem>>, vector<1x128xf32>
    %49 = vector.broadcast %48 : vector<1x128xf32> to vector<16x128xf32>
    %50 = arith.addf %47, %49 : vector<16x128xf32>
    %c0_35 = arith.constant 0 : index
    %c0_36 = arith.constant 0 : index
    %51 = vector.load %arg14[%c0_35, %c0_36] : memref<16x128xf32, #tpu.memory_space<vmem>>, vector<16x128xf32>
    tpu.vector_store %arg14[%c0_35, %c0_36], %50 {strides = array<i32>} : memref<16x128xf32, #tpu.memory_space<vmem>>, vector<16x128xf32>,
    return
  }
  func.func @transform_0(%arg0: i32) -> (i32, i32) {
    %c0_i32 = arith.constant 0 : i32
    %c0_i32_0 = arith.constant 0 : i32
    return %arg0, %c0_i32 : i32, i32
  }
  func.func @transform_1(%arg0: i32) -> (i32, i32) {
    %c0_i32 = arith.constant 0 : i32
    %c0_i32_0 = arith.constant 0 : i32
    %c0_i32_1 = arith.constant 0 : i32
    return %c0_i32, %c0_i32_0 : i32, i32
  }
  func.func @transform_2(%arg0: i32) -> (i32, i32) {
    %c0_i32 = arith.constant 0 : i32
    %c0_i32_0 = arith.constant 0 : i32
    %c0_i32_1 = arith.constant 0 : i32
    return %c0_i32, %c0_i32_0 : i32, i32
  }
  func.func @transform_3(%arg0: i32) -> (i32, i32) {
    %c0_i32 = arith.constant 0 : i32
    %c0_i32_0 = arith.constant 0 : i32
    %c0_i32_1 = arith.constant 0 : i32
    return %c0_i32, %c0_i32_0 : i32, i32
  }
  func.func @transform_4(%arg0: i32) -> (i32, i32) {
    %c0_i32 = arith.constant 0 : i32
    %c0_i32_0 = arith.constant 0 : i32
    %c0_i32_1 = arith.constant 0 : i32
    return %c0_i32, %c0_i32_0 : i32, i32
  }
  func.func @transform_5(%arg0: i32) -> (i32, i32) {
    %c0_i32 = arith.constant 0 : i32
    %c0_i32_0 = arith.constant 0 : i32
    %c0_i32_1 = arith.constant 0 : i32
    return %c0_i32, %c0_i32_0 : i32, i32
  }
  func.func @transform_6(%arg0: i32) -> (i32, i32) {
    %c0_i32 = arith.constant 0 : i32
    %c0_i32_0 = arith.constant 0 : i32
    %c0_i32_1 = arith.constant 0 : i32
    return %c0_i32, %c0_i32_0 : i32, i32
  }
  func.func @transform_7(%arg0: i32) -> (i32, i32) {
    %c0_i32 = arith.constant 0 : i32
    %c0_i32_0 = arith.constant 0 : i32
    %c0_i32_1 = arith.constant 0 : i32
    return %c0_i32, %c0_i32_0 : i32, i32
  }
  func.func @transform_8(%arg0: i32) -> (i32, i32) {
    %c0_i32 = arith.constant 0 : i32
    %c0_i32_0 = arith.constant 0 : i32
    %c0_i32_1 = arith.constant 0 : i32
    return %c0_i32, %c0_i32_0 : i32, i32
  }
  func.func @transform_9(%arg0: i32) -> (i32, i32) {
    %c0_i32 = arith.constant 0 : i32
    %c0_i32_0 = arith.constant 0 : i32
    %c0_i32_1 = arith.constant 0 : i32
    return %c0_i32, %c0_i32_0 : i32, i32
  }
  func.func @transform_10(%arg0: i32) -> (i32, i32) {
    %c0_i32 = arith.constant 0 : i32
    %c0_i32_0 = arith.constant 0 : i32
    %c0_i32_1 = arith.constant 0 : i32
    return %c0_i32, %c0_i32_0 : i32, i32
  }
  func.func @transform_11(%arg0: i32) -> (i32, i32) {
    %c0_i32 = arith.constant 0 : i32
    %c0_i32_0 = arith.constant 0 : i32
    %c0_i32_1 = arith.constant 0 : i32
    return %c0_i32, %c0_i32_0 : i32, i32
  }
  func.func @transform_12(%arg0: i32) -> (i32, i32) {
    %c0_i32 = arith.constant 0 : i32
    %c0_i32_0 = arith.constant 0 : i32
    %c0_i32_1 = arith.constant 0 : i32
    return %c0_i32, %c0_i32_0 : i32, i32
  }
  func.func @transform_13(%arg0: i32) -> (i32, i32) {
    %c0_i32 = arith.constant 0 : i32
    %c0_i32_0 = arith.constant 0 : i32
    return %arg0, %c0_i32 : i32, i32
  }
}

</mosaic_0001>

<llo_original>
// kernel: tpu_custom_call.1
$region0: #{tpu_custom_call.1}
  #allocation0 [shape = 'u32[]', space=smem, size = 0x4, offset = 0x4, fixed_abs, tag = 'smem constant byte address 0x4 - core index']
  #allocation1 [shape = 'u32[72,128]{1,0:T(1,128)}', space=vmem, size = 0x9000, scoped, tag = 'internal scratch']
  %s0 = inlined_call_operand.vmem [shape: bf16[32,16], index: 0, kind: input, shape index: {}]
  %s1 = inlined_call_operand.vmem [shape: bf16[16,128], index: 1, kind: input, shape index: {}]
  %s2 = inlined_call_operand.vmem [shape: f32[1,128], index: 2, kind: input, shape index: {}]
  %s3 = inlined_call_operand.hbm [shape: bf16[128,128], index: 3, kind: input, shape index: {}]
  %s4 = inlined_call_operand.vmem [shape: f32[1,128], index: 4, kind: input, shape index: {}]
  %s5 = inlined_call_operand.hbm [shape: bf16[128,128], index: 5, kind: input, shape index: {}]
  %s6 = inlined_call_operand.vmem [shape: f32[1,128], index: 6, kind: input, shape index: {}]
  %s7 = inlined_call_operand.hbm [shape: bf16[128,128], index: 7, kind: input, shape index: {}]
  %s8 = inlined_call_operand.vmem [shape: f32[1,128], index: 8, kind: input, shape index: {}]
  %s9 = inlined_call_operand.hbm [shape: bf16[128,128], index: 9, kind: input, shape index: {}]
  %s10 = inlined_call_operand.vmem [shape: f32[1,128], index: 10, kind: input, shape index: {}]
  %s11 = inlined_call_operand.hbm [shape: bf16[128,128], index: 11, kind: input, shape index: {}]
  %s12 = inlined_call_operand.vmem [shape: f32[1,128], index: 12, kind: input, shape index: {}]
  %s13 = inlined_call_operand.hbm [shape: f32[32,128], index: 13, kind: output, shape index: {}]
  %s14 = sld [smem:[#allocation0]]
  $region105: #{tpu_custom_call.1} parent=0
    _
  %s16 = ssub.s32 1, %s14
  %s17 = scalar_select 0, %s16, %s14
  $region1: #{tpu_custom_call.1} parent=0
    #allocation2 [shape = 'u8[32768]{0}', space=vmem, size = 0x8000, scoped, tag = 'input window, operand 3, single buffered']
    #allocation3 [shape = 's32[2]{0}', space=sflag, size = 0x8, scoped, tag = 'scoped memory for tpu_custom_call.1']
    #allocation4 [shape = 's32[2]{0}', space=sflag, size = 0x8, scoped, tag = 'scoped memory for tpu_custom_call.1']
    #allocation5 [shape = 'u8[32768]{0}', space=vmem, size = 0x8000, scoped, tag = 'input window, operand 5, single buffered']
    #allocation6 [shape = 's32[1]{0}', space=sflag, size = 0x4, scoped, tag = 'scoped memory for tpu_custom_call.1']
    #allocation7 [shape = 'u8[32768]{0}', space=vmem, size = 0x8000, scoped, tag = 'input window, operand 7, single buffered']
    #allocation8 [shape = 'u8[32768]{0}', space=vmem, size = 0x8000, scoped, tag = 'input window, operand 9, single buffered']
    #allocation9 [shape = 's32[1]{0}', space=sflag, size = 0x4, scoped, tag = 'scoped memory for tpu_custom_call.1']
    #allocation10 [shape = 'u8[32768]{0}', space=vmem, size = 0x8000, scoped, tag = 'input window, operand 11, single buffered']
    #allocation11 [shape = 'u8[16384]{0}', space=vmem, size = 0x4000, scoped, tag = 'output window, operand 0']
    %18 = vsyncpa [#allocation3], 0
    %19 = vsyncpa [#allocation6], 0
    %20 = vsyncpa [#allocation9], 0
    %21 = vsyncpa [#allocation4], 0
    %s22 = scalar_lea.sflag [#allocation4], 1
    %23 = vsyncpa %s22, 0
    loop: start=0, step=1, limit=4
    $region2: #{tpu_custom_call.1} parent=1 // loop_pre_header
      _
    $region3: #{tpu_custom_call.1} parent=1 // loop_header
      %s25 = sphi 0, %s29
      %p26 = scmp.ge.s32.totalorder %s25, 4
      %s35 = sphi 0, %s37
      %s38 = sphi 0, %s35
      %s39 = sphi 0, %s38
      %s55 = sphi 0, %s39
      %s59 = sphi 0, %s59
      %s61 = sphi 0, %s59
      %s62 = sphi 0, %s61
      %s76 = sphi 0, %s62
      %s80 = sphi 0, %s80
      %s82 = sphi 0, %s80
      %s83 = sphi 0, %s82
      %s97 = sphi 0, %s83
      %s101 = sphi 0, %s101
      %s103 = sphi 0, %s101
      %s104 = sphi 0, %s103
      %s118 = sphi 0, %s104
      %s122 = sphi 0, %s122
      %s124 = sphi 0, %s122
      %s125 = sphi 0, %s124
      %s139 = sphi 0, %s125
      %s143 = sphi 0, %s143
      %s145 = sphi 0, %s143
      %s146 = sphi 0, %s145
      %s160 = sphi 0, %s146
      %s164 = sphi 0, %s164
      %s166 = sphi 0, %s164
      %s167 = sphi 0, %s166
      %s181 = sphi 0, %s167
      %s185 = sphi 0, %s185
      %s187 = sphi 0, %s185
      %s188 = sphi 0, %s187
      %s202 = sphi 0, %s188
      %s206 = sphi 0, %s206
      %s208 = sphi 0, %s206
      %s209 = sphi 0, %s208
      %s223 = sphi 0, %s209
      %s227 = sphi 0, %s227
      %s229 = sphi 0, %s227
      %s230 = sphi 0, %s229
      %s244 = sphi 0, %s230
      %s248 = sphi 0, %s248
      %s250 = sphi 0, %s248
      %s251 = sphi 0, %s250
      %s265 = sphi 0, %s251
      %s269 = sphi 0, %s269
      %s271 = sphi 0, %s269
      %s272 = sphi 0, %s271
      %s286 = sphi 0, %s272
      %s290 = sphi 0, %s290
      %s292 = sphi 0, %s290
      %s293 = sphi 0, %s292
      %s307 = sphi 0, %s293
      %s313 = sphi 0, %s315
      %s316 = sphi 0, %s313
      %s317 = sphi 0, %s316
      %s333 = sphi 0, %s317
    $region4: #{tpu_custom_call.1} parent=1 // loop_header_branch
      %28 = sbr.rel (%p26) target = $region8
    $region5: #{tpu_custom_call.1} parent=1 // loop_body
      %s30 = ssub.s32 %s25, 1
      %s31 = ssub.s32 %s25, 2
      %s32 = sadd.s32 %s25, 1
      %s33 = ssub.s32 %s25, %s32
      %p34 = scmp.eq.s32.totalorder %s33, 0
      %s36 = sadd.s32 %s35, 1
      %s37 = scalar_select %p34, %s35, %s36
      %p40 = pneg %p34
      %p41 = scmp.eq.s32.totalorder %s25, 1
      %p42 = por %p40, %p41
      %p43 = scmp.ne.s32.totalorder %s35, %s38
      %p44 = scmp.eq.s32.totalorder %s25, 0
      %p45 = por %p43, %p44
      %p46 = scmp.ne.s32.totalorder %s35, %s38
      %p47 = scmp.eq.s32.totalorder %s30, 1
      %p48 = por %p46, %p47
      %p49 = scmp.ne.s32.totalorder %s38, %s39
      %p50 = scmp.eq.s32.totalorder %s30, 0
      %p51 = por %p49, %p50
      %p52 = scmp.ne.s32.totalorder %s38, %s39
      %p53 = scmp.eq.s32.totalorder %s31, 1
      %p54 = por %p52, %p53
      %p56 = scmp.ne.s32.totalorder %s39, %s55
      %p57 = scmp.eq.s32.totalorder %s31, 0
      %p58 = por %p56, %p57
      %s60 = sadd.s32 %s59, 1
      %p63 = scmp.eq.s32.totalorder %s25, 1
      %p64 = scmp.ne.s32.totalorder %s59, %s61
      %p65 = scmp.eq.s32.totalorder %s25, 0
      %p66 = por %p64, %p65
      %p67 = scmp.ne.s32.totalorder %s59, %s61
      %p68 = scmp.eq.s32.totalorder %s30, 1
      %p69 = por %p67, %p68
      %p70 = scmp.ne.s32.totalorder %s61, %s62
      %p71 = scmp.eq.s32.totalorder %s30, 0
      %p72 = por %p70, %p71
      %p73 = scmp.ne.s32.totalorder %s61, %s62
      %p74 = scmp.eq.s32.totalorder %s31, 1
      %p75 = por %p73, %p74
      %p77 = scmp.ne.s32.totalorder %s62, %s76
      %p78 = scmp.eq.s32.totalorder %s31, 0
      %p79 = por %p77, %p78
      %s81 = sadd.s32 %s80, 1
      %p84 = scmp.eq.s32.totalorder %s25, 1
      %p85 = scmp.ne.s32.totalorder %s80, %s82
      %p86 = scmp.eq.s32.totalorder %s25, 0
      %p87 = por %p85, %p86
      %p88 = scmp.ne.s32.totalorder %s80, %s82
      %p89 = scmp.eq.s32.totalorder %s30, 1
      %p90 = por %p88, %p89
      %p91 = scmp.ne.s32.totalorder %s82, %s83
      %p92 = scmp.eq.s32.totalorder %s30, 0
      %p93 = por %p91, %p92
      %p94 = scmp.ne.s32.totalorder %s82, %s83
      %p95 = scmp.eq.s32.totalorder %s31, 1
      %p96 = por %p94, %p95
      %p98 = scmp.ne.s32.totalorder %s83, %s97
      %p99 = scmp.eq.s32.totalorder %s31, 0
      %p100 = por %p98, %p99
      %s102 = sadd.s32 %s101, 1
      %p105 = scmp.eq.s32.totalorder %s25, 1
      %p106 = scmp.ne.s32.totalorder %s101, %s103
      %p107 = scmp.eq.s32.totalorder %s25, 0
      %p108 = por %p106, %p107
      %p109 = scmp.ne.s32.totalorder %s101, %s103
      %p110 = scmp.eq.s32.totalorder %s30, 1
      %p111 = por %p109, %p110
      %p112 = scmp.ne.s32.totalorder %s103, %s104
      %p113 = scmp.eq.s32.totalorder %s30, 0
      %p114 = por %p112, %p113
      %p115 = scmp.ne.s32.totalorder %s103, %s104
      %p116 = scmp.eq.s32.totalorder %s31, 1
      %p117 = por %p115, %p116
      %p119 = scmp.ne.s32.totalorder %s104, %s118
      %p120 = scmp.eq.s32.totalorder %s31, 0
      %p121 = por %p119, %p120
      %s123 = sadd.s32 %s122, 1
      %p126 = scmp.eq.s32.totalorder %s25, 1
      %p127 = scmp.ne.s32.totalorder %s122, %s124
      %p128 = scmp.eq.s32.totalorder %s25, 0
      %p129 = por %p127, %p128
      %p130 = scmp.ne.s32.totalorder %s122, %s124
      %p131 = scmp.eq.s32.totalorder %s30, 1
      %p132 = por %p130, %p131
      %p133 = scmp.ne.s32.totalorder %s124, %s125
      %p134 = scmp.eq.s32.totalorder %s30, 0
      %p135 = por %p133, %p134
      %p136 = scmp.ne.s32.totalorder %s124, %s125
      %p137 = scmp.eq.s32.totalorder %s31, 1
      %p138 = por %p136, %p137
      %p140 = scmp.ne.s32.totalorder %s125, %s139
      %p141 = scmp.eq.s32.totalorder %s31, 0
      %p142 = por %p140, %p141
      %s144 = sadd.s32 %s143, 1
      %p147 = scmp.eq.s32.totalorder %s25, 1
      %p148 = scmp.ne.s32.totalorder %s143, %s145
      %p149 = scmp.eq.s32.totalorder %s25, 0
      %p150 = por %p148, %p149
      %p151 = scmp.ne.s32.totalorder %s143, %s145
      %p152 = scmp.eq.s32.totalorder %s30, 1
      %p153 = por %p151, %p152
      %p154 = scmp.ne.s32.totalorder %s145, %s146
      %p155 = scmp.eq.s32.totalorder %s30, 0
      %p156 = por %p154, %p155
      %p157 = scmp.ne.s32.totalorder %s145, %s146
      %p158 = scmp.eq.s32.totalorder %s31, 1
      %p159 = por %p157, %p158
      %p161 = scmp.ne.s32.totalorder %s146, %s160
      %p162 = scmp.eq.s32.totalorder %s31, 0
      %p163 = por %p161, %p162
      %s165 = sadd.s32 %s164, 1
      %p168 = scmp.eq.s32.totalorder %s25, 1
      %p169 = scmp.ne.s32.totalorder %s164, %s166
      %p170 = scmp.eq.s32.totalorder %s25, 0
      %p171 = por %p169, %p170
      %p172 = scmp.ne.s32.totalorder %s164, %s166
      %p173 = scmp.eq.s32.totalorder %s30, 1
      %p174 = por %p172, %p173
      %p175 = scmp.ne.s32.totalorder %s166, %s167
      %p176 = scmp.eq.s32.totalorder %s30, 0
      %p177 = por %p175, %p176
      %p178 = scmp.ne.s32.totalorder %s166, %s167
      %p179 = scmp.eq.s32.totalorder %s31, 1
      %p180 = por %p178, %p179
      %p182 = scmp.ne.s32.totalorder %s167, %s181
      %p183 = scmp.eq.s32.totalorder %s31, 0
      %p184 = por %p182, %p183
      %s186 = sadd.s32 %s185, 1
      %p189 = scmp.eq.s32.totalorder %s25, 1
      %p190 = scmp.ne.s32.totalorder %s185, %s187
      %p191 = scmp.eq.s32.totalorder %s25, 0
      %p192 = por %p190, %p191
      %p193 = scmp.ne.s32.totalorder %s185, %s187
      %p194 = scmp.eq.s32.totalorder %s30, 1
      %p195 = por %p193, %p194
      %p196 = scmp.ne.s32.totalorder %s187, %s188
      %p197 = scmp.eq.s32.totalorder %s30, 0
      %p198 = por %p196, %p197
      %p199 = scmp.ne.s32.totalorder %s187, %s188
      %p200 = scmp.eq.s32.totalorder %s31, 1
      %p201 = por %p199, %p200
      %p203 = scmp.ne.s32.totalorder %s188, %s202
      %p204 = scmp.eq.s32.totalorder %s31, 0
      %p205 = por %p203, %p204
      %s207 = sadd.s32 %s206, 1
      %p210 = scmp.eq.s32.totalorder %s25, 1
      %p211 = scmp.ne.s32.totalorder %s206, %s208
      %p212 = scmp.eq.s32.totalorder %s25, 0
      %p213 = por %p211, %p212
      %p214 = scmp.ne.s32.totalorder %s206, %s208
      %p215 = scmp.eq.s32.totalorder %s30, 1
      %p216 = por %p214, %p215
      %p217 = scmp.ne.s32.totalorder %s208, %s209
      %p218 = scmp.eq.s32.totalorder %s30, 0
      %p219 = por %p217, %p218
      %p220 = scmp.ne.s32.totalorder %s208, %s209
      %p221 = scmp.eq.s32.totalorder %s31, 1
      %p222 = por %p220, %p221
      %p224 = scmp.ne.s32.totalorder %s209, %s223
      %p225 = scmp.eq.s32.totalorder %s31, 0
      %p226 = por %p224, %p225
      %s228 = sadd.s32 %s227, 1
      %p231 = scmp.eq.s32.totalorder %s25, 1
      %p232 = scmp.ne.s32.totalorder %s227, %s229
      %p233 = scmp.eq.s32.totalorder %s25, 0
      %p234 = por %p232, %p233
      %p235 = scmp.ne.s32.totalorder %s227, %s229
      %p236 = scmp.eq.s32.totalorder %s30, 1
      %p237 = por %p235, %p236
      %p238 = scmp.ne.s32.totalorder %s229, %s230
      %p239 = scmp.eq.s32.totalorder %s30, 0
      %p240 = por %p238, %p239
      %p241 = scmp.ne.s32.totalorder %s229, %s230
      %p242 = scmp.eq.s32.totalorder %s31, 1
      %p243 = por %p241, %p242
      %p245 = scmp.ne.s32.totalorder %s230, %s244
      %p246 = scmp.eq.s32.totalorder %s31, 0
      %p247 = por %p245, %p246
      %s249 = sadd.s32 %s248, 1
      %p252 = scmp.eq.s32.totalorder %s25, 1
      %p253 = scmp.ne.s32.totalorder %s248, %s250
      %p254 = scmp.eq.s32.totalorder %s25, 0
      %p255 = por %p253, %p254
      %p256 = scmp.ne.s32.totalorder %s248, %s250
      %p257 = scmp.eq.s32.totalorder %s30, 1
      %p258 = por %p256, %p257
      %p259 = scmp.ne.s32.totalorder %s250, %s251
      %p260 = scmp.eq.s32.totalorder %s30, 0
      %p261 = por %p259, %p260
      %p262 = scmp.ne.s32.totalorder %s250, %s251
      %p263 = scmp.eq.s32.totalorder %s31, 1
      %p264 = por %p262, %p263
      %p266 = scmp.ne.s32.totalorder %s251, %s265
      %p267 = scmp.eq.s32.totalorder %s31, 0
      %p268 = por %p266, %p267
      %s270 = sadd.s32 %s269, 1
      %p273 = scmp.eq.s32.totalorder %s25, 1
      %p274 = scmp.ne.s32.totalorder %s269, %s271
      %p275 = scmp.eq.s32.totalorder %s25, 0
      %p276 = por %p274, %p275
      %p277 = scmp.ne.s32.totalorder %s269, %s271
      %p278 = scmp.eq.s32.totalorder %s30, 1
      %p279 = por %p277, %p278
      %p280 = scmp.ne.s32.totalorder %s271, %s272
      %p281 = scmp.eq.s32.totalorder %s30, 0
      %p282 = por %p280, %p281
      %p283 = scmp.ne.s32.totalorder %s271, %s272
      %p284 = scmp.eq.s32.totalorder %s31, 1
      %p285 = por %p283, %p284
      %p287 = scmp.ne.s32.totalorder %s272, %s286
      %p288 = scmp.eq.s32.totalorder %s31, 0
      %p289 = por %p287, %p288
      %s291 = sadd.s32 %s290, 1
      %p294 = scmp.eq.s32.totalorder %s25, 1
      %p295 = scmp.ne.s32.totalorder %s290, %s292
      %p296 = scmp.eq.s32.totalorder %s25, 0
      %p297 = por %p295, %p296
      %p298 = scmp.ne.s32.totalorder %s290, %s292
      %p299 = scmp.eq.s32.totalorder %s30, 1
      %p300 = por %p298, %p299
      %p301 = scmp.ne.s32.totalorder %s292, %s293
      %p302 = scmp.eq.s32.totalorder %s30, 0
      %p303 = por %p301, %p302
      %p304 = scmp.ne.s32.totalorder %s292, %s293
      %p305 = scmp.eq.s32.totalorder %s31, 1
      %p306 = por %p304, %p305
      %p308 = scmp.ne.s32.totalorder %s293, %s307
      %p309 = scmp.eq.s32.totalorder %s31, 0
      %p310 = por %p308, %p309
      %s311 = ssub.s32 %s25, %s32
      %p312 = scmp.eq.s32.totalorder %s311, 0
      %s314 = sadd.s32 %s313, 1
      %s315 = scalar_select %p312, %s313, %s314
      %p318 = pneg %p312
      %p319 = scmp.eq.s32.totalorder %s25, 1
      %p320 = por %p318, %p319
      %p321 = scmp.ne.s32.totalorder %s313, %s316
      %p322 = scmp.eq.s32.totalorder %s25, 0
      %p323 = por %p321, %p322
      %p324 = scmp.ne.s32.totalorder %s313, %s316
      %p325 = scmp.eq.s32.totalorder %s30, 1
      %p326 = por %p324, %p325
      %p327 = scmp.ne.s32.totalorder %s316, %s317
      %p328 = scmp.eq.s32.totalorder %s30, 0
      %p329 = por %p327, %p328
      %p330 = scmp.ne.s32.totalorder %s316, %s317
      %p331 = scmp.eq.s32.totalorder %s31, 1
      %p332 = por %p330, %p331
      %p334 = scmp.ne.s32.totalorder %s317, %s333
      %p335 = scmp.eq.s32.totalorder %s31, 0
      %p336 = por %p334, %p335
      %p337 = scmp.le.s32.totalorder 1, %s25
      %p338 = scmp.lt.s32.totalorder %s25, 3
      %p339 = pnand %p337, %p338
      %p340 = pneg %p339
      // Predicated region
      $region9: #{tpu_custom_call.1} parent=5 // pred_check
        _
      $region10: #{tpu_custom_call.1} parent=5 // pred_check_branch
        %342 = sbr.rel (%p339) target = $region12
      $region11: #{tpu_custom_call.1} parent=5 // pred_region
        %s343 = ssub.s32 %s25, 1
        // Predicated region
        $region13: #{tpu_custom_call.1} parent=11 // pred_check
          %p344 = pneg %p72
        $region14: #{tpu_custom_call.1} parent=11 // pred_check_branch
          %346 = sbr.rel (%p344) target = $region16
        $region15: #{tpu_custom_call.1} parent=11 // pred_region
          _
        $region16: #{tpu_custom_call.1} parent=11 // pred_fallthru
          _
        // Predicated region
        $region17: #{tpu_custom_call.1} parent=11 // pred_check
          %p347 = pneg %p93
        $region18: #{tpu_custom_call.1} parent=11 // pred_check_branch
          %349 = sbr.rel (%p347) target = $region20
        $region19: #{tpu_custom_call.1} parent=11 // pred_region
          _
        $region20: #{tpu_custom_call.1} parent=11 // pred_fallthru
          _
        // Predicated region
        $region21: #{tpu_custom_call.1} parent=11 // pred_check
          %p350 = pneg %p114
        $region22: #{tpu_custom_call.1} parent=11 // pred_check_branch
          %352 = sbr.rel (%p350) target = $region24
        $region23: #{tpu_custom_call.1} parent=11 // pred_region
          %354 = vsyncadd [#allocation3], 0
          %s355 = sshll.u32 %s3, 4
          %s356 = int_to_ptr.hbm [resolvable:$true] %s355
          %s357 = sshll.u32 [#allocation2], 4
          %s358 = int_to_ptr.vmem [resolvable:$true] %s357
          %363 = dma.hbm_to_vmem [thread:$0]  %s356, 1024, %s358, [#allocation3], 64, 64, 4
        $region24: #{tpu_custom_call.1} parent=11 // pred_fallthru
          _
        // Predicated region
        $region25: #{tpu_custom_call.1} parent=11 // pred_check
          %p364 = pneg %p135
        $region26: #{tpu_custom_call.1} parent=11 // pred_check_branch
          %366 = sbr.rel (%p364) target = $region28
        $region27: #{tpu_custom_call.1} parent=11 // pred_region
          _
        $region28: #{tpu_custom_call.1} parent=11 // pred_fallthru
          _
        // Predicated region
        $region29: #{tpu_custom_call.1} parent=11 // pred_check
          %p367 = pneg %p156
        $region30: #{tpu_custom_call.1} parent=11 // pred_check_branch
          %369 = sbr.rel (%p367) target = $region32
        $region31: #{tpu_custom_call.1} parent=11 // pred_region
          %371 = vsyncadd [#allocation6], 0
          %s372 = sshll.u32 %s5, 4
          %s373 = int_to_ptr.hbm [resolvable:$true] %s372
          %s374 = sshll.u32 [#allocation5], 4
          %s375 = int_to_ptr.vmem [resolvable:$true] %s374
          %380 = dma.hbm_to_vmem [thread:$0]  %s373, 1024, %s375, [#allocation6], 64, 64, 4
        $region32: #{tpu_custom_call.1} parent=11 // pred_fallthru
          _
        // Predicated region
        $region33: #{tpu_custom_call.1} parent=11 // pred_check
          %p381 = pneg %p177
        $region34: #{tpu_custom_call.1} parent=11 // pred_check_branch
          %383 = sbr.rel (%p381) target = $region36
        $region35: #{tpu_custom_call.1} parent=11 // pred_region
          _
        $region36: #{tpu_custom_call.1} parent=11 // pred_fallthru
          _
        // Predicated region
        $region37: #{tpu_custom_call.1} parent=11 // pred_check
          %p384 = pneg %p198
        $region38: #{tpu_custom_call.1} parent=11 // pred_check_branch
          %386 = sbr.rel (%p384) target = $region40
        $region39: #{tpu_custom_call.1} parent=11 // pred_region
          %388 = vsyncadd [#allocation6], 0
          %s389 = sshll.u32 %s7, 4
          %s390 = int_to_ptr.hbm [resolvable:$true] %s389
          %s391 = sshll.u32 [#allocation7], 4
          %s392 = int_to_ptr.vmem [resolvable:$true] %s391
          %397 = dma.hbm_to_vmem [thread:$0]  %s390, 1024, %s392, [#allocation6], 64, 64, 4
        $region40: #{tpu_custom_call.1} parent=11 // pred_fallthru
          _
        // Predicated region
        $region41: #{tpu_custom_call.1} parent=11 // pred_check
          %p398 = pneg %p219
        $region42: #{tpu_custom_call.1} parent=11 // pred_check_branch
          %400 = sbr.rel (%p398) target = $region44
        $region43: #{tpu_custom_call.1} parent=11 // pred_region
          _
        $region44: #{tpu_custom_call.1} parent=11 // pred_fallthru
          _
        // Predicated region
        $region45: #{tpu_custom_call.1} parent=11 // pred_check
          %p401 = pneg %p240
        $region46: #{tpu_custom_call.1} parent=11 // pred_check_branch
          %403 = sbr.rel (%p401) target = $region48
        $region47: #{tpu_custom_call.1} parent=11 // pred_region
          %405 = vsyncadd [#allocation9], 0
          %s406 = sshll.u32 %s9, 4
          %s407 = int_to_ptr.hbm [resolvable:$true] %s406
          %s408 = sshll.u32 [#allocation8], 4
          %s409 = int_to_ptr.vmem [resolvable:$true] %s408
          %414 = dma.hbm_to_vmem [thread:$0]  %s407, 1024, %s409, [#allocation9], 64, 64, 4
        $region48: #{tpu_custom_call.1} parent=11 // pred_fallthru
          _
        // Predicated region
        $region49: #{tpu_custom_call.1} parent=11 // pred_check
          %p415 = pneg %p261
        $region50: #{tpu_custom_call.1} parent=11 // pred_check_branch
          %417 = sbr.rel (%p415) target = $region52
        $region51: #{tpu_custom_call.1} parent=11 // pred_region
          _
        $region52: #{tpu_custom_call.1} parent=11 // pred_fallthru
          _
        // Predicated region
        $region53: #{tpu_custom_call.1} parent=11 // pred_check
          %p418 = pneg %p282
        $region54: #{tpu_custom_call.1} parent=11 // pred_check_branch
          %420 = sbr.rel (%p418) target = $region56
        $region55: #{tpu_custom_call.1} parent=11 // pred_region
          %422 = vsyncadd [#allocation9], 0
          %s423 = sshll.u32 %s11, 4
          %s424 = int_to_ptr.hbm [resolvable:$true] %s423
          %s425 = sshll.u32 [#allocation10], 4
          %s426 = int_to_ptr.vmem [resolvable:$true] %s425
          %431 = dma.hbm_to_vmem [thread:$0]  %s424, 1024, %s426, [#allocation9], 64, 64, 4
        $region56: #{tpu_custom_call.1} parent=11 // pred_fallthru
          _
        // Predicated region
        $region57: #{tpu_custom_call.1} parent=11 // pred_check
          %p432 = pneg %p303
        $region58: #{tpu_custom_call.1} parent=11 // pred_check_branch
          %434 = sbr.rel (%p432) target = $region60
        $region59: #{tpu_custom_call.1} parent=11 // pred_region
          _
        $region60: #{tpu_custom_call.1} parent=11 // pred_fallthru
          _
      $region12: #{tpu_custom_call.1} parent=5 // pred_fallthru
        _
      %p435 = scmp.lt.s32.totalorder %s25, 2
      // Predicated region
      $region61: #{tpu_custom_call.1} parent=5 // pred_check
        %p436 = pneg %p435
      $region62: #{tpu_custom_call.1} parent=5 // pred_check_branch
        %438 = sbr.rel (%p436) target = $region64
      $region63: #{tpu_custom_call.1} parent=5 // pred_region
        // Predicated region
        $region65: #{tpu_custom_call.1} parent=63 // pred_check
          %p439 = pneg %p45
        $region66: #{tpu_custom_call.1} parent=63 // pred_check_branch
          %441 = sbr.rel (%p439) target = $region68
        $region67: #{tpu_custom_call.1} parent=63 // pred_region
          %s442 = smul.u32 2, %s25
          %p443 = scmp.lt.s32.totalorder %s442, 3
          %s444 = scalar_select %p443, %s442, 3
          %s445 = smul.addr %s444, 4
          %s446 = scalar_lea.vmem %s0, %s445
          %s447 = smul.u32 2, %s25
        $region68: #{tpu_custom_call.1} parent=63 // pred_fallthru
          _
      $region64: #{tpu_custom_call.1} parent=5 // pred_fallthru
        _
      %p448 = scmp.le.s32.totalorder 1, %s25
      %p449 = scmp.lt.s32.totalorder %s25, 3
      %p450 = pnand %p448, %p449
      %p451 = pneg %p450
      // Predicated region
      $region69: #{tpu_custom_call.1} parent=5 // pred_check
        _
      $region70: #{tpu_custom_call.1} parent=5 // pred_check_branch
        %453 = sbr.rel (%p450) target = $region72
      $region71: #{tpu_custom_call.1} parent=5 // pred_region
        %s454 = ssub.s32 %s25, 1
        // Predicated region
        $region73: #{tpu_custom_call.1} parent=71 // pred_check
          %p455 = pneg %p114
        $region74: #{tpu_custom_call.1} parent=71 // pred_check_branch
          %457 = sbr.rel (%p455) target = $region76
        $region75: #{tpu_custom_call.1} parent=71 // pred_region
          %459 = dma.done [#allocation3], 1024
        $region76: #{tpu_custom_call.1} parent=71 // pred_fallthru
          _
        // Predicated region
        $region77: #{tpu_custom_call.1} parent=71 // pred_check
          %p460 = pneg %p156
        $region78: #{tpu_custom_call.1} parent=71 // pred_check_branch
          %462 = sbr.rel (%p460) target = $region80
        $region79: #{tpu_custom_call.1} parent=71 // pred_region
          %464 = dma.done [#allocation6], 1024
        $region80: #{tpu_custom_call.1} parent=71 // pred_fallthru
          _
        // Predicated region
        $region81: #{tpu_custom_call.1} parent=71 // pred_check
          %p465 = pneg %p198
        $region82: #{tpu_custom_call.1} parent=71 // pred_check_branch
          %467 = sbr.rel (%p465) target = $region84
        $region83: #{tpu_custom_call.1} parent=71 // pred_region
          %469 = dma.done [#allocation6], 1024
        $region84: #{tpu_custom_call.1} parent=71 // pred_fallthru
          _
        // Predicated region
        $region85: #{tpu_custom_call.1} parent=71 // pred_check
          %p470 = pneg %p240
        $region86: #{tpu_custom_call.1} parent=71 // pred_check_branch
          %472 = sbr.rel (%p470) target = $region88
        $region87: #{tpu_custom_call.1} parent=71 // pred_region
          %474 = dma.done [#allocation9], 1024
        $region88: #{tpu_custom_call.1} parent=71 // pred_fallthru
          _
        // Predicated region
        $region89: #{tpu_custom_call.1} parent=71 // pred_check
          %p475 = pneg %p282
        $region90: #{tpu_custom_call.1} parent=71 // pred_check_branch
          %477 = sbr.rel (%p475) target = $region92
        $region91: #{tpu_custom_call.1} parent=71 // pred_region
          %479 = dma.done [#allocation9], 1024
        $region92: #{tpu_custom_call.1} parent=71 // pred_fallthru
          _
        %s480 = smul.u32 2, %s30
        %p481 = scmp.lt.s32.totalorder %s480, 3
        %s482 = scalar_select %p481, %s480, 3
        %s483 = smul.addr %s482, 4
        %s484 = scalar_lea.vmem %s0, %s483
        %p485 = pneg %p51
        %p486 = pneg %p48
        %p487 = pneg %p72
        %p488 = pneg %p69
        %p489 = pneg %p93
        %p490 = pneg %p90
        %p491 = pneg %p114
        %p492 = pneg %p111
        %p493 = pneg %p135
        %p494 = pneg %p132
        %p495 = pneg %p156
        %p496 = pneg %p153
        %p497 = pneg %p177
        %p498 = pneg %p174
        %p499 = pneg %p198
        %p500 = pneg %p195
        %p501 = pneg %p219
        %p502 = pneg %p216
        %p503 = pneg %p240
        %p504 = pneg %p237
        %p505 = pneg %p261
        %p506 = pneg %p258
        %p507 = pneg %p282
        %p508 = pneg %p279
        %p509 = pneg %p303
        %p510 = pneg %p300
        %p511 = pneg %p329
        %p512 = pneg %p326
        %s513 = sand.u32 %s316, 1
        %s514 = scalar_lea.sflag [#allocation4], %s513
        %s515 = sand.u32 %s316, 1
        %s516 = smul.addr %s515, 16
        %s517 = scalar_lea.vmem [#allocation11], %s516
        %s518 = smul.u32 2, %s30
        %p519 = scmp.lt.s32.totalorder %s518, 3
        %s520 = scalar_select %p519, %s518, 3
        %s521 = smul.addr %s520, 4
        %s522 = scalar_lea.vmem %s0, %s521
        %s523 = smul.u32 2, %s30
        %s524 = smul.u32 2, %s30
        %v526 = vld [vmem:[%s522] sm:$0xf]
        %v527 = vld [vmem:[%s522 + $0x4] sm:$0xf]
        %v528 = vld [vmem:[%s1] sm:$0xf]
        %v529 = vld [vmem:[%s1 + $0x4] sm:$0xf]
        %v530 = vld [vmem:[%s2] sm:$0x1]
        %v532 = vperm.slane %v530, 0
        %v536 = vunpack.c.l.b16 %v526
        %v537 = vunpack.c.l.b16 %v527
        %v538 = vpack.c.b16 %v537, %v536
        %v541 = vunpack.c.l.b16 %v528
        %v542 = vunpack.c.l.b16 %v529
        %v543 = vpack.c.b16 %v542, %v541
        %vm545 = vcmask 130048
        %v547 = vsel %vm545, %v538, 0
        %549 = vmatpush.bf16.msra.mxu0 0
        %550 = vmatpush.bf16.msra.mxu0 0
        %551 = vmatpush.bf16.msra.mxu0 0
        %552 = vmatpush.bf16.msra.mxu0 0
        %553 = vmatpush.bf16.msra.mxu0 0
        %554 = vmatpush.bf16.msra.mxu0 0
        %555 = vmatpush.bf16.msra.mxu0 0
        %556 = vmatpush.bf16.msra.mxu0 %v543
        %557 = vmatmul.bf16.gmra.mxu0 %v547
        %v558 = vpop.f32.mrf.mxu0
        %v559 = vadd.f32 %v532, %v558
        %v560 = vpop.f32.mrf.mxu0
        %v561 = vadd.f32 %v532, %v560
        %562 = vdwg.mxu0
        %v563 = vmul.f32 %v559, 0.01
        %v564 = vmul.f32 %v561, 0.01
        %v565 = vmax.f32 %v559, %v563
        %v566 = vmax.f32 %v561, %v564
        %v567 = vpack.c.bf16 %v566, %v565
        %v568 = vld [vmem:[#allocation2] sm:$0xf]
        %v569 = vld [vmem:[#allocation2 + $0x4] sm:$0xf]
        %v570 = vld [vmem:[#allocation2 + $0x8] sm:$0xf]
        %v571 = vld [vmem:[#allocation2 + $0xc] sm:$0xf]
        %v572 = vld [vmem:[#allocation2 + $0x10] sm:$0xf]
        %v573 = vld [vmem:[#allocation2 + $0x14] sm:$0xf]
        %v574 = vld [vmem:[#allocation2 + $0x18] sm:$0xf]
        %v575 = vld [vmem:[#allocation2 + $0x1c] sm:$0xf]
        %v576 = vld [vmem:[#allocation2 + $0x20] sm:$0xf]
        %v577 = vld [vmem:[#allocation2 + $0x24] sm:$0xf]
        %v578 = vld [vmem:[#allocation2 + $0x28] sm:$0xf]
        %v579 = vld [vmem:[#allocation2 + $0x2c] sm:$0xf]
        %v580 = vld [vmem:[#allocation2 + $0x30] sm:$0xf]
        %v581 = vld [vmem:[#allocation2 + $0x34] sm:$0xf]
        %v582 = vld [vmem:[#allocation2 + $0x38] sm:$0xf]
        %v583 = vld [vmem:[#allocation2 + $0x3c] sm:$0xf]
        %v584 = vld [vmem:[%s4] sm:$0x1]
        %v586 = vperm.slane %v584, 0
        %v604 = vunpack.c.l.b16 %v568
        %v605 = vunpack.c.l.b16 %v569
        %v606 = vunpack.c.l.b16 %v570
        %v607 = vunpack.c.l.b16 %v571
        %v608 = vunpack.c.l.b16 %v572
        %v609 = vunpack.c.l.b16 %v573
        %v610 = vunpack.c.l.b16 %v574
        %v611 = vunpack.c.l.b16 %v575
        %v612 = vunpack.c.l.b16 %v576
        %v613 = vunpack.c.l.b16 %v577
        %v614 = vunpack.c.l.b16 %v578
        %v615 = vunpack.c.l.b16 %v579
        %v616 = vunpack.c.l.b16 %v580
        %v617 = vunpack.c.l.b16 %v581
        %v618 = vunpack.c.l.b16 %v582
        %v619 = vunpack.c.l.b16 %v583
        %v620 = vpack.c.b16 %v605, %v604
        %v621 = vpack.c.b16 %v607, %v606
        %v622 = vpack.c.b16 %v609, %v608
        %v623 = vpack.c.b16 %v611, %v610
        %v624 = vpack.c.b16 %v613, %v612
        %v625 = vpack.c.b16 %v615, %v614
        %v626 = vpack.c.b16 %v617, %v616
        %v627 = vpack.c.b16 %v619, %v618
        %636 = vmatpush.bf16.msra.mxu0 %v627
        %637 = vmatpush.bf16.msra.mxu0 %v626
        %638 = vmatpush.bf16.msra.mxu0 %v625
        %639 = vmatpush.bf16.msra.mxu0 %v624
        %640 = vmatpush.bf16.msra.mxu0 %v623
        %641 = vmatpush.bf16.msra.mxu0 %v622
        %642 = vmatpush.bf16.msra.mxu0 %v621
        %643 = vmatpush.bf16.msra.mxu0 %v620
        %644 = vmatmul.bf16.gmra.mxu0 %v567
        %v645 = vpop.f32.mrf.mxu0
        %v646 = vadd.f32 %v586, %v645
        %v647 = vpop.f32.mrf.mxu0
        %v648 = vadd.f32 %v586, %v647
        %649 = vdwg.mxu0
        %v650 = vmul.f32 %v646, 0.01
        %v651 = vmul.f32 %v648, 0.01
        %v652 = vmax.f32 %v646, %v650
        %v653 = vmax.f32 %v648, %v651
        %v654 = vpack.c.bf16 %v653, %v652
        %v655 = vld [vmem:[#allocation5] sm:$0xf]
        %v656 = vld [vmem:[#allocation5 + $0x4] sm:$0xf]
        %v657 = vld [vmem:[#allocation5 + $0x8] sm:$0xf]
        %v658 = vld [vmem:[#allocation5 + $0xc] sm:$0xf]
        %v659 = vld [vmem:[#allocation5 + $0x10] sm:$0xf]
        %v660 = vld [vmem:[#allocation5 + $0x14] sm:$0xf]
        %v661 = vld [vmem:[#allocation5 + $0x18] sm:$0xf]
        %v662 = vld [vmem:[#allocation5 + $0x1c] sm:$0xf]
        %v663 = vld [vmem:[#allocation5 + $0x20] sm:$0xf]
        %v664 = vld [vmem:[#allocation5 + $0x24] sm:$0xf]
        %v665 = vld [vmem:[#allocation5 + $0x28] sm:$0xf]
        %v666 = vld [vmem:[#allocation5 + $0x2c] sm:$0xf]
        %v667 = vld [vmem:[#allocation5 + $0x30] sm:$0xf]
        %v668 = vld [vmem:[#allocation5 + $0x34] sm:$0xf]
        %v669 = vld [vmem:[#allocation5 + $0x38] sm:$0xf]
        %v670 = vld [vmem:[#allocation5 + $0x3c] sm:$0xf]
        %v671 = vld [vmem:[%s6] sm:$0x1]
        %v673 = vperm.slane %v671, 0
        %v691 = vunpack.c.l.b16 %v655
        %v692 = vunpack.c.l.b16 %v656
        %v693 = vunpack.c.l.b16 %v657
        %v694 = vunpack.c.l.b16 %v658
        %v695 = vunpack.c.l.b16 %v659
        %v696 = vunpack.c.l.b16 %v660
        %v697 = vunpack.c.l.b16 %v661
        %v698 = vunpack.c.l.b16 %v662
        %v699 = vunpack.c.l.b16 %v663
        %v700 = vunpack.c.l.b16 %v664
        %v701 = vunpack.c.l.b16 %v665
        %v702 = vunpack.c.l.b16 %v666
        %v703 = vunpack.c.l.b16 %v667
        %v704 = vunpack.c.l.b16 %v668
        %v705 = vunpack.c.l.b16 %v669
        %v706 = vunpack.c.l.b16 %v670
        %v707 = vpack.c.b16 %v692, %v691
        %v708 = vpack.c.b16 %v694, %v693
        %v709 = vpack.c.b16 %v696, %v695
        %v710 = vpack.c.b16 %v698, %v697
        %v711 = vpack.c.b16 %v700, %v699
        %v712 = vpack.c.b16 %v702, %v701
        %v713 = vpack.c.b16 %v704, %v703
        %v714 = vpack.c.b16 %v706, %v705
        %723 = vmatpush.bf16.msra.mxu0 %v714
        %724 = vmatpush.bf16.msra.mxu0 %v713
        %725 = vmatpush.bf16.msra.mxu0 %v712
        %726 = vmatpush.bf16.msra.mxu0 %v711
        %727 = vmatpush.bf16.msra.mxu0 %v710
        %728 = vmatpush.bf16.msra.mxu0 %v709
        %729 = vmatpush.bf16.msra.mxu0 %v708
        %730 = vmatpush.bf16.msra.mxu0 %v707
        %731 = vmatmul.bf16.gmra.mxu0 %v654
        %v732 = vpop.f32.mrf.mxu0
        %v733 = vadd.f32 %v673, %v732
        %v734 = vpop.f32.mrf.mxu0
        %v735 = vadd.f32 %v673, %v734
        %736 = vdwg.mxu0
        %v737 = vmul.f32 %v733, 0.01
        %v738 = vmul.f32 %v735, 0.01
        %v739 = vmax.f32 %v733, %v737
        %v740 = vmax.f32 %v735, %v738
        %v741 = vpack.c.bf16 %v740, %v739
        %v742 = vld [vmem:[#allocation7] sm:$0xf]
        %v743 = vld [vmem:[#allocation7 + $0x4] sm:$0xf]
        %v744 = vld [vmem:[#allocation7 + $0x8] sm:$0xf]
        %v745 = vld [vmem:[#allocation7 + $0xc] sm:$0xf]
        %v746 = vld [vmem:[#allocation7 + $0x10] sm:$0xf]
        %v747 = vld [vmem:[#allocation7 + $0x14] sm:$0xf]
        %v748 = vld [vmem:[#allocation7 + $0x18] sm:$0xf]
        %v749 = vld [vmem:[#allocation7 + $0x1c] sm:$0xf]
        %v750 = vld [vmem:[#allocation7 + $0x20] sm:$0xf]
        %v751 = vld [vmem:[#allocation7 + $0x24] sm:$0xf]
        %v752 = vld [vmem:[#allocation7 + $0x28] sm:$0xf]
        %v753 = vld [vmem:[#allocation7 + $0x2c] sm:$0xf]
        %v754 = vld [vmem:[#allocation7 + $0x30] sm:$0xf]
        %v755 = vld [vmem:[#allocation7 + $0x34] sm:$0xf]
        %v756 = vld [vmem:[#allocation7 + $0x38] sm:$0xf]
        %v757 = vld [vmem:[#allocation7 + $0x3c] sm:$0xf]
        %v758 = vld [vmem:[%s8] sm:$0x1]
        %v760 = vperm.slane %v758, 0
        %v778 = vunpack.c.l.b16 %v742
        %v779 = vunpack.c.l.b16 %v743
        %v780 = vunpack.c.l.b16 %v744
        %v781 = vunpack.c.l.b16 %v745
        %v782 = vunpack.c.l.b16 %v746
        %v783 = vunpack.c.l.b16 %v747
        %v784 = vunpack.c.l.b16 %v748
        %v785 = vunpack.c.l.b16 %v749
        %v786 = vunpack.c.l.b16 %v750
        %v787 = vunpack.c.l.b16 %v751
        %v788 = vunpack.c.l.b16 %v752
        %v789 = vunpack.c.l.b16 %v753
        %v790 = vunpack.c.l.b16 %v754
        %v791 = vunpack.c.l.b16 %v755
        %v792 = vunpack.c.l.b16 %v756
        %v793 = vunpack.c.l.b16 %v757
        %v794 = vpack.c.b16 %v779, %v778
        %v795 = vpack.c.b16 %v781, %v780
        %v796 = vpack.c.b16 %v783, %v782
        %v797 = vpack.c.b16 %v785, %v784
        %v798 = vpack.c.b16 %v787, %v786
        %v799 = vpack.c.b16 %v789, %v788
        %v800 = vpack.c.b16 %v791, %v790
        %v801 = vpack.c.b16 %v793, %v792
        %810 = vmatpush.bf16.msra.mxu0 %v801
        %811 = vmatpush.bf16.msra.mxu0 %v800
        %812 = vmatpush.bf16.msra.mxu0 %v799
        %813 = vmatpush.bf16.msra.mxu0 %v798
        %814 = vmatpush.bf16.msra.mxu0 %v797
        %815 = vmatpush.bf16.msra.mxu0 %v796
        %816 = vmatpush.bf16.msra.mxu0 %v795
        %817 = vmatpush.bf16.msra.mxu0 %v794
        %818 = vmatmul.bf16.gmra.mxu0 %v741
        %v819 = vpop.f32.mrf.mxu0
        %v820 = vadd.f32 %v760, %v819
        %v821 = vpop.f32.mrf.mxu0
        %v822 = vadd.f32 %v760, %v821
        %823 = vdwg.mxu0
        %v824 = vmul.f32 %v820, 0.01
        %v825 = vmul.f32 %v822, 0.01
        %v826 = vmax.f32 %v820, %v824
        %v827 = vmax.f32 %v822, %v825
        %v828 = vpack.c.bf16 %v827, %v826
        %v829 = vld [vmem:[#allocation8] sm:$0xf]
        %v830 = vld [vmem:[#allocation8 + $0x4] sm:$0xf]
        %v831 = vld [vmem:[#allocation8 + $0x8] sm:$0xf]
        %v832 = vld [vmem:[#allocation8 + $0xc] sm:$0xf]
        %v833 = vld [vmem:[#allocation8 + $0x10] sm:$0xf]
        %v834 = vld [vmem:[#allocation8 + $0x14] sm:$0xf]
        %v835 = vld [vmem:[#allocation8 + $0x18] sm:$0xf]
        %v836 = vld [vmem:[#allocation8 + $0x1c] sm:$0xf]
        %v837 = vld [vmem:[#allocation8 + $0x20] sm:$0xf]
        %v838 = vld [vmem:[#allocation8 + $0x24] sm:$0xf]
        %v839 = vld [vmem:[#allocation8 + $0x28] sm:$0xf]
        %v840 = vld [vmem:[#allocation8 + $0x2c] sm:$0xf]
        %v841 = vld [vmem:[#allocation8 + $0x30] sm:$0xf]
        %v842 = vld [vmem:[#allocation8 + $0x34] sm:$0xf]
        %v843 = vld [vmem:[#allocation8 + $0x38] sm:$0xf]
        %v844 = vld [vmem:[#allocation8 + $0x3c] sm:$0xf]
        %v845 = vld [vmem:[%s10] sm:$0x1]
        %v847 = vperm.slane %v845, 0
        %v865 = vunpack.c.l.b16 %v829
        %v866 = vunpack.c.l.b16 %v830
        %v867 = vunpack.c.l.b16 %v831
        %v868 = vunpack.c.l.b16 %v832
        %v869 = vunpack.c.l.b16 %v833
        %v870 = vunpack.c.l.b16 %v834
        %v871 = vunpack.c.l.b16 %v835
        %v872 = vunpack.c.l.b16 %v836
        %v873 = vunpack.c.l.b16 %v837
        %v874 = vunpack.c.l.b16 %v838
        %v875 = vunpack.c.l.b16 %v839
        %v876 = vunpack.c.l.b16 %v840
        %v877 = vunpack.c.l.b16 %v841
        %v878 = vunpack.c.l.b16 %v842
        %v879 = vunpack.c.l.b16 %v843
        %v880 = vunpack.c.l.b16 %v844
        %v881 = vpack.c.b16 %v866, %v865
        %v882 = vpack.c.b16 %v868, %v867
        %v883 = vpack.c.b16 %v870, %v869
        %v884 = vpack.c.b16 %v872, %v871
        %v885 = vpack.c.b16 %v874, %v873
        %v886 = vpack.c.b16 %v876, %v875
        %v887 = vpack.c.b16 %v878, %v877
        %v888 = vpack.c.b16 %v880, %v879
        %897 = vmatpush.bf16.msra.mxu0 %v888
        %898 = vmatpush.bf16.msra.mxu0 %v887
        %899 = vmatpush.bf16.msra.mxu0 %v886
        %900 = vmatpush.bf16.msra.mxu0 %v885
        %901 = vmatpush.bf16.msra.mxu0 %v884
        %902 = vmatpush.bf16.msra.mxu0 %v883
        %903 = vmatpush.bf16.msra.mxu0 %v882
        %904 = vmatpush.bf16.msra.mxu0 %v881
        %905 = vmatmul.bf16.gmra.mxu0 %v828
        %v906 = vpop.f32.mrf.mxu0
        %v907 = vadd.f32 %v847, %v906
        %v908 = vpop.f32.mrf.mxu0
        %v909 = vadd.f32 %v847, %v908
        %910 = vdwg.mxu0
        %v911 = vmul.f32 %v907, 0.01
        %v912 = vmul.f32 %v909, 0.01
        %v913 = vmax.f32 %v907, %v911
        %v914 = vmax.f32 %v909, %v912
        %v915 = vpack.c.bf16 %v914, %v913
        %v916 = vld [vmem:[#allocation10] sm:$0xf]
        %v917 = vld [vmem:[#allocation10 + $0x4] sm:$0xf]
        %v918 = vld [vmem:[#allocation10 + $0x8] sm:$0xf]
        %v919 = vld [vmem:[#allocation10 + $0xc] sm:$0xf]
        %v920 = vld [vmem:[#allocation10 + $0x10] sm:$0xf]
        %v921 = vld [vmem:[#allocation10 + $0x14] sm:$0xf]
        %v922 = vld [vmem:[#allocation10 + $0x18] sm:$0xf]
        %v923 = vld [vmem:[#allocation10 + $0x1c] sm:$0xf]
        %v924 = vld [vmem:[#allocation10 + $0x20] sm:$0xf]
        %v925 = vld [vmem:[#allocation10 + $0x24] sm:$0xf]
        %v926 = vld [vmem:[#allocation10 + $0x28] sm:$0xf]
        %v927 = vld [vmem:[#allocation10 + $0x2c] sm:$0xf]
        %v928 = vld [vmem:[#allocation10 + $0x30] sm:$0xf]
        %v929 = vld [vmem:[#allocation10 + $0x34] sm:$0xf]
        %v930 = vld [vmem:[#allocation10 + $0x38] sm:$0xf]
        %v931 = vld [vmem:[#allocation10 + $0x3c] sm:$0xf]
        %v932 = vld [vmem:[%s12] sm:$0x1]
        %v934 = vperm.slane %v932, 0
        %v952 = vunpack.c.l.b16 %v916
        %v953 = vunpack.c.l.b16 %v917
        %v954 = vunpack.c.l.b16 %v918
        %v955 = vunpack.c.l.b16 %v919
        %v956 = vunpack.c.l.b16 %v920
        %v957 = vunpack.c.l.b16 %v921
        %v958 = vunpack.c.l.b16 %v922
        %v959 = vunpack.c.l.b16 %v923
        %v960 = vunpack.c.l.b16 %v924
        %v961 = vunpack.c.l.b16 %v925
        %v962 = vunpack.c.l.b16 %v926
        %v963 = vunpack.c.l.b16 %v927
        %v964 = vunpack.c.l.b16 %v928
        %v965 = vunpack.c.l.b16 %v929
        %v966 = vunpack.c.l.b16 %v930
        %v967 = vunpack.c.l.b16 %v931
        %v968 = vpack.c.b16 %v953, %v952
        %v969 = vpack.c.b16 %v955, %v954
        %v970 = vpack.c.b16 %v957, %v956
        %v971 = vpack.c.b16 %v959, %v958
        %v972 = vpack.c.b16 %v961, %v960
        %v973 = vpack.c.b16 %v963, %v962
        %v974 = vpack.c.b16 %v965, %v964
        %v975 = vpack.c.b16 %v967, %v966
        %984 = vmatpush.bf16.msra.mxu0 %v975
        %985 = vmatpush.bf16.msra.mxu0 %v974
        %986 = vmatpush.bf16.msra.mxu0 %v973
        %987 = vmatpush.bf16.msra.mxu0 %v972
        %988 = vmatpush.bf16.msra.mxu0 %v971
        %989 = vmatpush.bf16.msra.mxu0 %v970
        %990 = vmatpush.bf16.msra.mxu0 %v969
        %991 = vmatpush.bf16.msra.mxu0 %v968
        %992 = vmatmul.bf16.gmra.mxu0 %v915
        %v993 = vpop.f32.mrf.mxu0
        %v994 = vadd.f32 %v934, %v993
        %v995 = vpop.f32.mrf.mxu0
        %v996 = vadd.f32 %v934, %v995
        %997 = vdwg.mxu0
        %998 = vst [vmem:[%s517] sm:$0xff] %v994
        %999 = vst [vmem:[%s517 + $0x8] sm:$0xff] %v996
        %s1000 = sand.u32 %s316, 1
        %s1001 = scalar_lea.sflag [#allocation4], %s1000
        %s1002 = sand.u32 %s316, 1
        %s1003 = smul.addr %s1002, 16
        %s1004 = scalar_lea.vmem [#allocation11], %s1003
        // Predicated region
        $region93: #{tpu_custom_call.1} parent=71 // pred_check
          %p1005 = pneg %p326
        $region94: #{tpu_custom_call.1} parent=71 // pred_check_branch
          %1007 = sbr.rel (%p1005) target = $region96
        $region95: #{tpu_custom_call.1} parent=71 // pred_region
          %s1008 = smul.u32 2, %s30
          %1010 = vsyncadd %s1001, 0
          %s1011 = smul.addr %s1008, 8
          %s1012 = scalar_lea.hbm %s13, %s1011
          %s1013 = sshll.u32 %s1004, 4
          %s1014 = int_to_ptr.vmem [resolvable:$true] %s1013
          %s1015 = sshll.u32 %s1012, 4
          %s1016 = int_to_ptr.hbm [resolvable:$true] %s1015
          %1021 = dma.vmem_to_hbm [thread:$0]  %s1014, 256, %s1016, %s1001, 128, 128, 8
        $region96: #{tpu_custom_call.1} parent=71 // pred_fallthru
          _
      $region72: #{tpu_custom_call.1} parent=5 // pred_fallthru
        _
      %p1022 = scmp.le.s32.totalorder 2, %s25
      // Predicated region
      $region97: #{tpu_custom_call.1} parent=5 // pred_check
        %p1023 = pneg %p1022
      $region98: #{tpu_custom_call.1} parent=5 // pred_check_branch
        %1025 = sbr.rel (%p1023) target = $region100
      $region99: #{tpu_custom_call.1} parent=5 // pred_region
        %s1026 = ssub.s32 %s25, 2
        // Predicated region
        $region101: #{tpu_custom_call.1} parent=99 // pred_check
          %p1027 = pneg %p332
        $region102: #{tpu_custom_call.1} parent=99 // pred_check_branch
          %1029 = sbr.rel (%p1027) target = $region104
        $region103: #{tpu_custom_call.1} parent=99 // pred_region
          %s1030 = sand.u32 %s317, 1
          %s1031 = scalar_lea.sflag [#allocation4], %s1030
          %s1032 = sand.u32 %s317, 1
          %s1033 = smul.addr %s1032, 16
          %s1034 = scalar_lea.vmem [#allocation11], %s1033
          %1036 = dma.done %s1031, 256
        $region104: #{tpu_custom_call.1} parent=99 // pred_fallthru
          _
      $region100: #{tpu_custom_call.1} parent=5 // pred_fallthru
        _
    $region6: #{tpu_custom_call.1} parent=1 // loop_footer
      %s29 = sadd.s32 1, %s25
    $region7: #{tpu_custom_call.1} parent=1 // loop_footer_branch
      %24 = sbr.rel target = $region3
    $region8: #{tpu_custom_call.1} parent=1 // loop_exit
      _
    %1037 = vsyncpa [#allocation3], 1
    %s1038 = scalar_lea.sflag [#allocation3], 1
    %1039 = vsyncpa %s1038, 1
    %1040 = vsyncpa [#allocation6], 1
    %1041 = vsyncpa [#allocation9], 1
    %1042 = vsyncpa [#allocation4], 1
    %s1043 = scalar_lea.sflag [#allocation4], 1
    %1044 = vsyncpa %s1043, 1

</llo_original>
